<compile_context>
chip_gen: v7x
topology: tpu7x:2x2x1
jax: 0.10.0
libtpu: 0.0.40
codegen_flags: <defaults>
</compile_context>

<pallas_src>
import functools

import jax
import jax.numpy as jnp
from jax.experimental import pallas as pl
from jax.experimental.pallas import tpu as pltpu


# Keep the multi-buffered VMEM working set under ~28 MiB: safe on v7x
# (64 MiB physical / 32 MiB default scoped) and everywhere else.
_VMEM_TILE_BUDGET = 28 * 1024 * 1024


def _round_up(x, m):
    return (x + m - 1) // m * m


def _pow2_floor(n):
    p = 1
    while p * 2 <= n:
        p *= 2
    return p


def _choose_tn(vocab_size, tn):
    """Vocab tile size: a power-of-two multiple of 256 so that V_pad stays
    divisible by any later (halved) tile, and stores stay lane-dense."""
    tn_rounded = min(_round_up(tn, 256), _round_up(vocab_size, 256))
    tn_eff = 256 * _pow2_floor(max(1, tn_rounded // 256))
    v_pad = _round_up(vocab_size, tn_eff)
    return tn_eff, v_pad


def prepare_decoder_weight(embedding_weight, *, tn=1024, compute_dtype=jnp.bfloat16):
    """One-time (init-time) weight preparation.

    Cast to the compute dtype, zero-pad the vocab dimension to a tile
    multiple, and transpose to (H, V_pad).  Call this ONCE outside the jitted
    decode step so the per-call kernel never re-reads / re-writes the (V,H)
    matrix in HBM.
    """
    V, H = embedding_weight.shape
    _, v_pad = _choose_tn(V, tn)
    w = embedding_weight.astype(compute_dtype)
    if v_pad != V:
        w = jnp.pad(w, ((0, v_pad - V), (0, 0)))
    return jnp.transpose(w)  # (H, V_pad), contiguous once, amortized over calls


def _decoder_kernel(x_ref, wt_ref, o_ref):
    # x_ref: (tm, H), wt_ref: (H, tn), o_ref: (tm, tn).
    # Canonical (M,K)x(K,N) matmul, f32 accumulation on the MXU.
    o_ref[...] = jnp.dot(
        x_ref[...], wt_ref[...], preferred_element_type=jnp.float32
    ).astype(o_ref.dtype)


@functools.partial(
    jax.jit,
    static_argnames=("vocab_size", "tm", "tn", "out_dtype", "allow_resident_m"),
)
def gpt2_decoder_prepared(
    hidden_states,
    w_prepared,
    *,
    vocab_size,
    tm=512,
    tn=1024,
    out_dtype=None,
    allow_resident_m=True,
):
    """hidden_states: (B,S,H); w_prepared: (H, V_pad) from prepare_decoder_weight."""
    B, S, H = hidden_states.shape
    H2, V_pad = w_prepared.shape
    assert H == H2, "hidden size mismatch between activations and prepared weight"
    assert V_pad % 256 == 0 and V_pad >= vocab_size, "weight must be prepared/padded"
    out_dtype = hidden_states.dtype if out_dtype is None else out_dtype

    in_bytes = jnp.dtype(w_prepared.dtype).itemsize
    out_bytes = jnp.dtype(out_dtype).itemsize

    M = B * S
    tn_eff, _ = _choose_tn(vocab_size, tn)
    if V_pad % tn_eff != 0:  # weight prepared with a different tn -> safe fallback
        tn_eff = 256

    def need(tm_, tn_, w_bufs):
        # activations double-buffered + weight buffers + output double-buffered
        return (2 * tm_ * H + w_bufs * tn_ * H) * in_bytes + 2 * tm_ * tn_ * out_bytes

    # Tile selection: prefer a fully VMEM-resident activation block (constant
    # index_map -> the activations are DMA'd from HBM exactly once per call);
    # otherwise fall back to tm (default 512) and shrink to fit the budget.
    m_full = _round_up(M, 16)
    if allow_resident_m and need(m_full, tn_eff, 2) <= _VMEM_TILE_BUDGET:
        tm_eff = m_full
    else:
        tm_eff = min(_round_up(tm, 16), m_full)
        while tm_eff > 16 and need(tm_eff, tn_eff, 3) > _VMEM_TILE_BUDGET:
            tm_eff = max(16, _round_up(tm_eff // 2, 16))
        while tn_eff > 256 and need(tm_eff, tn_eff, 3) > _VMEM_TILE_BUDGET:
            tn_eff //= 2  # stays a (power-of-two)*256, still divides V_pad

    M_pad = _round_up(M, tm_eff)
    grid_m = M_pad // tm_eff
    grid_n = V_pad // tn_eff

    # Per-call activation prep (small: M*H, not V*H).
    a = hidden_states.reshape(M, H).astype(w_prepared.dtype)
    if M_pad != M:
        a = jnp.pad(a, ((0, M_pad - M), (0, 0)))

    x_spec = pl.BlockSpec((tm_eff, H), lambda j, i: (i, 0))

    # Weight tile depends only on the OUTER vocab index j -> VMEM-resident
    # across the inner M loop; deeper buffering hides the j-boundary DMA when
    # there is more than one inner step to hide it behind.
    w_map = lambda j, i: (0, j)
    w_bufs = 2
    w_spec = pl.BlockSpec((H, tn_eff), w_map)
    if grid_m >= 2 and hasattr(pl, "Buffered"):
        try:
            w_spec = pl.BlockSpec((H, tn_eff), w_map, pipeline_mode=pl.Buffered(3))
            w_bufs = 3
        except TypeError:
            w_spec = pl.BlockSpec((H, tn_eff), w_map)

    o_spec = pl.BlockSpec((tm_eff, tn_eff), lambda j, i: (i, j))

    # Honest traffic estimate: activations re-streamed once per outer j unless
    # resident; weight streamed exactly once; output written once.
    act_streams = 1 if grid_m == 1 else grid_n
    cost = pl.CostEstimate(
        flops=2 * M_pad * H * V_pad,
        transcendentals=0,
        bytes_accessed=(act_streams * M_pad * H + V_pad * H) * in_bytes
        + M_pad * V_pad * out_bytes,
    )

    vmem_limit = int(max(need(tm_eff, tn_eff, w_bufs) + (4 << 20), 32 << 20))

    out = pl.pallas_call(
        _decoder_kernel,
        out_shape=jax.ShapeDtypeStruct((M_pad, V_pad), out_dtype),
        grid_spec=pltpu.PrefetchScalarGridSpec(
            num_scalar_prefetch=0,
            grid=(grid_n, grid_m),  # vocab OUTER, M INNER (weight-resident)
            in_specs=[x_spec, w_spec],
            out_specs=o_spec,
        ),
        compiler_params=pltpu.CompilerParams(
            # Pin the v7x megacore split to the vocab axis so each core
            # streams only its share of the embedding matrix.
            dimension_semantics=("parallel", "arbitrary"),
            vmem_limit_bytes=vmem_limit,
        ),
        cost_estimate=cost,
    )(a, w_prepared)

    return out[:M, :vocab_size].reshape(B, S, vocab_size)


def gpt2_decoder(
    hidden_states,
    embedding_weight,
    *,
    tm=512,
    tn=1024,
    compute_dtype=jnp.bfloat16,
    out_dtype=None,
    allow_resident_m=True,
):
    """Convenience wrapper matching the PyTorch module's forward signature.

    In a real pipeline call prepare_decoder_weight() once at init and reuse
    the prepared weight with gpt2_decoder_prepared() for every step.
    """
    V = embedding_weight.shape[0]
    w_prepared = prepare_decoder_weight(
        embedding_weight, tn=tn, compute_dtype=compute_dtype
    )
    return gpt2_decoder_prepared(
        hidden_states,
        w_prepared,
        vocab_size=V,
        tm=tm,
        tn=tn,
        out_dtype=out_dtype,
        allow_resident_m=allow_resident_m,
    )


if __name__ == "__main__":
    # --- Test 1: small config, init-time prepared weight (primary path). ---
    batch, seq, hidden_size, vocab_size = 2, 8, 32, 256

    key = jax.random.PRNGKey(0)
    k_x, k_w = jax.random.split(key)

    hidden_states = jax.random.normal(
        k_x, (batch, seq, hidden_size), dtype=jnp.float32
    )
    embedding_weight = 0.02 * jax.random.normal(
        k_w, (vocab_size, hidden_size), dtype=jnp.float32
    )

    w_prep = prepare_decoder_weight(embedding_weight)  # once, outside jit
    logits = gpt2_decoder_prepared(hidden_states, w_prep, vocab_size=vocab_size)
    jax.block_until_ready(logits)

    ref = jnp.einsum("bsh,vh->bsv", hidden_states, embedding_weight)
    assert logits.shape == (batch, seq, vocab_size)
    # bf16 inputs with f32 accumulation -> slightly looser tolerance vs f32 ref.
    assert jnp.allclose(logits, ref, atol=1e-2, rtol=1e-2)

    # --- Test 2: ragged vocab / tiny M (decode-like), convenience wrapper. ---
    b2, s2, v2 = 1, 5, 130
    hs2 = jax.random.normal(k_x, (b2, s2, hidden_size), dtype=jnp.float32)
    w2 = 0.02 * jax.random.normal(k_w, (v2, hidden_size), dtype=jnp.float32)
    logits2 = gpt2_decoder(hs2, w2)
    jax.block_until_ready(logits2)
    ref2 = jnp.einsum("bsh,vh->bsv", hs2, w2)
    assert logits2.shape == (b2, s2, v2)
    assert jnp.allclose(logits2, ref2, atol=1e-2, rtol=1e-2)

    # --- Test 3: multi-tile grid (exercises M padding, non-resident
    #     activations and the Buffered(3) weight pipeline) at small scale. ---
    b3, s3, h3, v3 = 2, 100, 128, 600
    k_x3, k_w3 = jax.random.split(jax.random.PRNGKey(0), 2)
    hs3 = jax.random.normal(k_x3, (b3, s3, h3), dtype=jnp.float32)
    w3 = 0.02 * jax.random.normal(k_w3, (v3, h3), dtype=jnp.float32)
    logits3 = gpt2_decoder(hs3, w3, tm=64, tn=256, allow_resident_m=False)
    jax.block_until_ready(logits3)
    ref3 = jnp.einsum("bsh,vh->bsv", hs3, w3)
    assert logits3.shape == (b3, s3, v3)
    assert jnp.allclose(logits3, ref3, atol=1e-2, rtol=1e-2)

    print("KERNEL_OK")
</pallas_src>

<mosaic_0001>
module attributes {stable_mosaic.version = 11 : i64} {
  func.func @_decoder_kernel(%arg0: i32, %arg1: i32, %arg2: memref<16x32xbf16, #tpu.memory_space<vmem>>, %arg3: memref<32x256xbf16, #tpu.memory_space<vmem>>, %arg4: memref<16x256xf32, #tpu.memory_space<vmem>>) attributes {dimension_semantics = [#tpu.dimension_semantics<parallel>, #tpu.dimension_semantics<arbitrary>], iteration_bounds = array<i64: 1, 1>, scalar_prefetch = 0 : i64, scratch_operands = 0 : i64, tpu.core_type = #tpu.core_type<tc>, window_params = [{transform_indices = @transform_0, window_bounds = array<i64: 16, 32>}, {transform_indices = @transform_1, window_bounds = array<i64: 32, 256>}, {transform_indices = @transform_2, window_bounds = array<i64: 16, 256>}]} {
    %c0 = arith.constant 0 : index
    %c0_0 = arith.constant 0 : index
    %0 = vector.load %arg2[%c0, %c0_0] : memref<16x32xbf16, #tpu.memory_space<vmem>>, vector<16x32xbf16>
    %c0_1 = arith.constant 0 : index
    %c0_2 = arith.constant 0 : index
    %1 = vector.load %arg3[%c0_1, %c0_2] : memref<32x256xbf16, #tpu.memory_space<vmem>>, vector<32x256xbf16>
    %cst = arith.constant dense<0.000000e+00> : vector<16x256xf32>
    %2 = tpu.matmul %0, %1, %cst {dimension_numbers = #tpu.dot_dimension_numbers<[1], [0], [0], [1], [0, 0, 1, 1], [], []>} : vector<16x32xbf16>, vector<32x256xbf16>, vector<16x256xf32> -> vector<16x256xf32>
    %c0_3 = arith.constant 0 : index
    %c0_4 = arith.constant 0 : index
    %3 = vector.load %arg4[%c0_3, %c0_4] : memref<16x256xf32, #tpu.memory_space<vmem>>, vector<16x256xf32>
    tpu.vector_store %arg4[%c0_3, %c0_4], %2 {strides = array<i32>} : memref<16x256xf32, #tpu.memory_space<vmem>>, vector<16x256xf32>,
    return
  }
  func.func @transform_0(%arg0: i32, %arg1: i32) -> (i32, i32) {
    %c0_i32 = arith.constant 0 : i32
    %c0_i32_0 = arith.constant 0 : i32
    return %arg1, %c0_i32 : i32, i32
  }
  func.func @transform_1(%arg0: i32, %arg1: i32) -> (i32, i32) {
    %c0_i32 = arith.constant 0 : i32
    %c0_i32_0 = arith.constant 0 : i32
    return %c0_i32, %arg0 : i32, i32
  }
  func.func @transform_2(%arg0: i32, %arg1: i32) -> (i32, i32) {
    %c0_i32 = arith.constant 0 : i32
    return %arg1, %arg0 : i32, i32
  }
}

</mosaic_0001>

<llo_original>
// kernel: gpt2_decoder_prepared.1
$region0: #{gpt2_decoder_prepared.1}
  #allocation0 [shape = 'u32[]', space=smem, size = 0x4, offset = 0x4, fixed_abs, tag = 'smem constant byte address 0x4 - core index']
  #allocation1 [shape = 'u32[144,128]{1,0:T(1,128)}', space=vmem, size = 0x12000, scoped, tag = 'internal scratch']
  %s0 = inlined_call_operand.vmem [shape: bf16[16,32], index: 0, kind: input, shape index: {}]
  %s1 = inlined_call_operand.hbm [shape: bf16[32,256], index: 1, kind: input, shape index: {}]
  %s2 = inlined_call_operand.hbm [shape: f32[16,256], index: 2, kind: output, shape index: {}]
  %s3 = sld [smem:[#allocation0]]
  $region22: #{gpt2_decoder_prepared.1} parent=0
    _
  %s5 = ssub.s32 1, %s3
  %s6 = scalar_select 0, %s5, %s3
  $region1: #{gpt2_decoder_prepared.1} parent=0
    #allocation2 [shape = 'u8[16384]{0}', space=vmem, size = 0x4000, scoped, tag = 'input window, operand 1, single buffered']
    #allocation3 [shape = 's32[1]{0}', space=sflag, size = 0x4, scoped, tag = 'scoped memory for gpt2_decoder_prepared.1']
    #allocation4 [shape = 's32[1]{0}', space=sflag, size = 0x4, scoped, tag = 'scoped memory for gpt2_decoder_prepared.1']
    #allocation5 [shape = 'u8[16384]{0}', space=vmem, size = 0x4000, scoped, tag = 'output window, operand 0, single buffered']
    %7 = vsyncpa [#allocation3], 0
    %8 = vsyncpa [#allocation4], 0
    // Predicated region
    $region2: #{gpt2_decoder_prepared.1} parent=1 // pred_check
      _
    $region3: #{gpt2_decoder_prepared.1} parent=1 // pred_check_branch
      %10 = sbr.rel (0) target = $region5
    $region4: #{gpt2_decoder_prepared.1} parent=1 // pred_region
      _
    $region5: #{gpt2_decoder_prepared.1} parent=1 // pred_fallthru
      _
    // Predicated region
    $region6: #{gpt2_decoder_prepared.1} parent=1 // pred_check
      _
    $region7: #{gpt2_decoder_prepared.1} parent=1 // pred_check_branch
      %12 = sbr.rel (0) target = $region9
    $region8: #{gpt2_decoder_prepared.1} parent=1 // pred_region
      %s14 = ssub.s32 512, 512
      %15 = vsyncadd [#allocation3], %s14
      %s16 = sshll.u32 [#allocation2], 4
      %s17 = int_to_ptr.vmem [resolvable:$true] %s16
      %22 = dma.hbm_to_vmem [thread:$0]  %s1, 512, %s17, [#allocation3], 128, 128, 8
    $region9: #{gpt2_decoder_prepared.1} parent=1 // pred_fallthru
      _
    // Predicated region
    $region10: #{gpt2_decoder_prepared.1} parent=1 // pred_check
      _
    $region11: #{gpt2_decoder_prepared.1} parent=1 // pred_check_branch
      %24 = sbr.rel (0) target = $region13
    $region12: #{gpt2_decoder_prepared.1} parent=1 // pred_region
      %25 = dma.done [#allocation3], 512
    $region13: #{gpt2_decoder_prepared.1} parent=1 // pred_fallthru
      _
    %v27 = vld [vmem:[%s0] sm:$0xf]
    %v28 = vld [vmem:[%s0 + $0x4] sm:$0xf]
    %v29 = vld [vmem:[#allocation2] sm:$0xff]
    %v30 = vld [vmem:[#allocation2 + $0x8] sm:$0xff]
    %v31 = vld [vmem:[#allocation2 + $0x10] sm:$0xff]
    %v32 = vld [vmem:[#allocation2 + $0x18] sm:$0xff]
    %v35 = vunpack.c.l.b16 %v27
    %v36 = vunpack.c.l.b16 %v28
    %v37 = vpack.c.b16 %v36, %v35
    %v42 = vunpack.c.l.b16 %v29
    %v43 = vunpack.c.h.b16 %v29
    %v44 = vunpack.c.l.b16 %v30
    %v45 = vunpack.c.h.b16 %v30
    %v46 = vunpack.c.l.b16 %v31
    %v47 = vunpack.c.h.b16 %v31
    %v48 = vunpack.c.l.b16 %v32
    %v49 = vunpack.c.h.b16 %v32
    %v50 = vpack.c.b16 %v44, %v42
    %v51 = vpack.c.b16 %v45, %v43
    %v52 = vpack.c.b16 %v48, %v46
    %v53 = vpack.c.b16 %v49, %v47
    %vm58 = vcmask 261120
    %v60 = vsel %vm58, %v37, 0
    %62 = vmatprep.subr.bf16.mxu0 %v51
    %63 = vmatpush1.bf16.msra.mxu0 %v50
    %64 = vmatprep.subr.bf16.mxu0 %v53
    %65 = vmatpush1.bf16.msra.mxu0 %v52
    %66 = vmatprep.subr.bf16.mxu0 0
    %67 = vmatpush1.bf16.msra.mxu0 0
    %68 = vmatprep.subr.bf16.mxu0 0
    %69 = vmatpush1.bf16.msra.mxu0 0
    %70 = vmatprep.subr.bf16.mxu0 0
    %71 = vmatpush1.bf16.msra.mxu0 0
    %72 = vmatprep.subr.bf16.mxu0 0
    %73 = vmatpush1.bf16.msra.mxu0 0
    %74 = vmatprep.subr.bf16.mxu0 0
    %75 = vmatpush1.bf16.msra.mxu0 0
    %76 = vmatprep.subr.bf16.mxu0 0
    %77 = vmatpush1.bf16.msra.mxu0 0
    %78 = vmatprep.subr.bf16.mxu0 0
    %79 = vmatpush1.bf16.msra.mxu0 0
    %80 = vmatprep.subr.bf16.mxu0 0
    %81 = vmatpush1.bf16.msra.mxu0 0
    %82 = vmatprep.subr.bf16.mxu0 0
    %83 = vmatpush1.bf16.msra.mxu0 0
    %84 = vmatprep.subr.bf16.mxu0 0
    %85 = vmatpush1.bf16.msra.mxu0 0
    %86 = vmatprep.subr.bf16.mxu0 0
    %87 = vmatpush1.bf16.msra.mxu0 0
    %88 = vmatprep.subr.bf16.mxu0 0
    %89 = vmatpush1.bf16.msra.mxu0 0
    %90 = vmatprep.subr.bf16.mxu0 0
    %91 = vmatpush1.bf16.msra.mxu0 0
    %92 = vmatprep.subr.bf16.mxu0 0
    %93 = vmatpush1.bf16.msra.mxu0 0
    %94 = vmatprep.mubr.bf16.mxu0 0
    %95 = vmatmul.mubr.bf16.gmra.mrb[0].mxu0 %v60
    %v96 = vpop.f32.mrb[0].mxu0
    %v97 = vadd.f32 0.0, %v96
    %v98 = vpop.f32.mrb[0].mxu0
    %v99 = vadd.f32 0.0, %v98
    %v100 = vpop.f32.mrb[0].mxu0
    %v101 = vadd.f32 0.0, %v100
    %v102 = vpop.f32.mrb[0].mxu0
    %v103 = vadd.f32 0.0, %v102
    %104 = vdwg.mxu0
    %105 = vst [vmem:[#allocation5] sm:$0xff] %v97
    %106 = vst [vmem:[#allocation5 + $0x8] sm:$0xff] %v99
    %107 = vst [vmem:[#allocation5 + $0x10] sm:$0xff] %v101
    %108 = vst [vmem:[#allocation5 + $0x18] sm:$0xff] %v103
    // Predicated region
    $region14: #{gpt2_decoder_prepared.1} parent=1 // pred_check
      _
    $region15: #{gpt2_decoder_prepared.1} parent=1 // pred_check_branch
      %110 = sbr.rel (0) target = $region17
    $region16: #{gpt2_decoder_prepared.1} parent=1 // pred_region
      %s112 = ssub.s32 512, 512
      %113 = vsyncadd [#allocation4], %s112
      %s114 = sshll.u32 [#allocation5], 4
      %s115 = int_to_ptr.vmem [resolvable:$true] %s114
      %120 = dma.vmem_to_hbm [thread:$0]  %s115, 512, %s2, [#allocation4], 256, 256, 16
    $region17: #{gpt2_decoder_prepared.1} parent=1 // pred_fallthru
      _
    // Predicated region
    $region18: #{gpt2_decoder_prepared.1} parent=1 // pred_check
      _
    $region19: #{gpt2_decoder_prepared.1} parent=1 // pred_check_branch
      %122 = sbr.rel (0) target = $region21
    $region20: #{gpt2_decoder_prepared.1} parent=1 // pred_region
      %123 = dma.done [#allocation4], 512
    $region21: #{gpt2_decoder_prepared.1} parent=1 // pred_fallthru
      _
    %124 = vsyncpa [#allocation3], 1
    %125 = vsyncpa [#allocation4], 1

</llo_original>
